<compile_context>
chip_gen: v7x
topology: tpu7x:2x2x1
jax: 0.10.0
libtpu: 0.0.40
codegen_flags: <defaults>
</compile_context>

<pallas_src>
import functools

import jax
import jax.numpy as jnp
from jax.experimental import pallas as pl
from jax.experimental.pallas import tpu as pltpu

_LANE = 128


# ------------------------------ Pallas kernel -------------------------------

def logreg_fused_kernel(x_ref, w_ref, b_ref, out_ref):
    """One batch-row tile: out = x @ W_fused + b_fused (all in VMEM)."""
    out = jnp.dot(x_ref[...], w_ref[...], preferred_element_type=jnp.float32)
    out_ref[...] = (out + b_ref[...]).astype(out_ref.dtype)


# -------------------------------- wrapper ------------------------------------

def _pick_tile_m(batch, hid, out_pad):
    """Batch-row tile: big & MXU-aligned for large B, one step for tiny B."""
    # Conservative VMEM budget so double-buffered x/out tiles fit even within
    # v7x's smaller scoped default (weights are tiny and resident).
    budget = 16 * 1024 * 1024
    per_row = 2 * (hid + out_pad) * 4            # double-buffered x + out, f32
    cap = max(8, budget // per_row)
    tile = min(512, cap)
    if tile >= _LANE:
        tile = (tile // _LANE) * _LANE           # multiple of 128 (MXU rows)
    else:
        tile = max(8, (tile // 8) * 8)
    b8 = pl.cdiv(batch, 8) * 8
    if b8 <= tile:                               # tiny batch: single grid step
        return b8
    return tile


def logreg_forward(params, x):
    """x: (B, hid_dim) float32 -> (B, n_classes) float32."""
    B, hid = x.shape
    w1, b1 = params["w1"], params["b1"]
    w2, b2 = params["w2"], params["b2"]
    w3, b3 = params["w3"], params["b3"]
    n_classes = w3.shape[1]

    # No activations between the Linear layers -> exact algebraic fusion
    # (up to fp reassociation) into one (hid, n_classes) affine map.
    w_fused = (w1 @ w2) @ w3                      # (hid, n_classes)
    b_fused = (b1 @ w2 + b2) @ w3 + b3            # (1, n_classes)

    # Lane-dense output: pad classes up to a full 128-lane register so the
    # kernel writes unmasked full-lane stores; slice real classes afterwards.
    out_pad = pl.cdiv(n_classes, _LANE) * _LANE
    w_fused = jnp.pad(w_fused, ((0, 0), (0, out_pad - n_classes)))
    b_fused = jnp.pad(b_fused, ((0, 0), (0, out_pad - n_classes)))

    # Batch tiling.  Keep the grid length even when >1 so v7x's two
    # TensorCores get equal work under dimension_semantics=("parallel",).
    tile_m = _pick_tile_m(B, hid, out_pad)
    steps = pl.cdiv(B, tile_m)
    if steps > 1 and steps % 2 == 1:
        steps += 1
    padded = steps * tile_m
    if padded != B:
        x = jnp.pad(x, ((0, padded - B), (0, 0)))

    out = pl.pallas_call(
        logreg_fused_kernel,
        out_shape=jax.ShapeDtypeStruct((padded, out_pad), jnp.float32),
        grid_spec=pltpu.PrefetchScalarGridSpec(
            num_scalar_prefetch=0,
            grid=(steps,),
            in_specs=[
                pl.BlockSpec((tile_m, hid), lambda i: (i, 0)),    # x row tile
                pl.BlockSpec((hid, out_pad), lambda i: (0, 0)),   # fused W (resident)
                pl.BlockSpec((1, out_pad), lambda i: (0, 0)),     # fused b (resident)
            ],
            out_specs=pl.BlockSpec((tile_m, out_pad), lambda i: (i, 0)),
        ),
        compiler_params=pltpu.CompilerParams(
            dimension_semantics=("parallel",)),   # both TCs on v7x; no-op on v5e/v6e
    )(x, w_fused, b_fused)
    return out[:B, :n_classes]


# ------------------------------- parameters ----------------------------------

def init_params(key, hid_dim, n_classes):
    """PyTorch nn.Linear default init; weights stored pre-transposed (in, out)."""
    dims = [(hid_dim, 64), (64, 8), (8, n_classes)]
    p = {}
    for idx, (fan_in, fan_out) in enumerate(dims, start=1):
        kw, kb, key = jax.random.split(key, 3)
        bound = 1.0 / jnp.sqrt(float(fan_in))
        p[f"w{idx}"] = jax.random.uniform(kw, (fan_in, fan_out), jnp.float32,
                                          -bound, bound)
        p[f"b{idx}"] = jax.random.uniform(kb, (1, fan_out), jnp.float32,
                                          -bound, bound)
    return p


def logreg_ref(params, x):
    """Unfused reference, mirrors the PyTorch forward exactly."""
    h = x @ params["w1"] + params["b1"]
    h = h @ params["w2"] + params["b2"]
    return h @ params["w3"] + params["b3"]


# ---------------------------------- main --------------------------------------

if __name__ == "__main__":
    hid_dim, n_classes = 32, 10

    key = jax.random.PRNGKey(0)
    kp, kx1, kx2 = jax.random.split(key, 3)
    params = init_params(kp, hid_dim, n_classes)

    fwd = jax.jit(logreg_forward)

    # Small batch (single grid step).
    x_small = jax.random.normal(kx1, (16, hid_dim), jnp.float32)
    out_small = fwd(params, x_small)
    jax.block_until_ready(out_small)
    assert out_small.shape == (16, n_classes)
    ref_small = logreg_ref(params, x_small)
    assert bool(jnp.all(jnp.isfinite(out_small)))
    assert bool(jnp.allclose(out_small, ref_small, atol=1e-4, rtol=1e-4)), \
        "small-batch mismatch vs. reference"

    # Larger, uneven batch (exercises padding + multi-step parallel grid).
    x_big = jax.random.normal(kx2, (600, hid_dim), jnp.float32)
    out_big = fwd(params, x_big)
    jax.block_until_ready(out_big)
    assert out_big.shape == (600, n_classes)
    ref_big = logreg_ref(params, x_big)
    assert bool(jnp.all(jnp.isfinite(out_big)))
    assert bool(jnp.allclose(out_big, ref_big, atol=1e-4, rtol=1e-4)), \
        "large-batch mismatch vs. reference"

    print("KERNEL_OK")
</pallas_src>

<mosaic_0001>
module attributes {stable_mosaic.version = 11 : i64} {
  func.func @logreg_fused_kernel(%arg0: i32, %arg1: memref<16x32xf32, #tpu.memory_space<vmem>>, %arg2: memref<32x128xf32, #tpu.memory_space<vmem>>, %arg3: memref<1x128xf32, #tpu.memory_space<vmem>>, %arg4: memref<16x128xf32, #tpu.memory_space<vmem>>) attributes {dimension_semantics = [#tpu.dimension_semantics<parallel>], iteration_bounds = array<i64: 1>, scalar_prefetch = 0 : i64, scratch_operands = 0 : i64, tpu.core_type = #tpu.core_type<tc>, window_params = [{transform_indices = @transform_0, window_bounds = array<i64: 16, 32>}, {pipeline_mode = #tpu.pipeline_mode<synchronous>, transform_indices = @transform_1, window_bounds = array<i64: 32, 128>}, {pipeline_mode = #tpu.pipeline_mode<synchronous>, transform_indices = @transform_2, window_bounds = array<i64: 1, 128>}, {transform_indices = @transform_3, window_bounds = array<i64: 16, 128>}]} {
    %c0 = arith.constant 0 : index
    %c0_0 = arith.constant 0 : index
    %0 = vector.load %arg1[%c0, %c0_0] : memref<16x32xf32, #tpu.memory_space<vmem>>, vector<16x32xf32>
    %c0_1 = arith.constant 0 : index
    %c0_2 = arith.constant 0 : index
    %1 = vector.load %arg2[%c0_1, %c0_2] : memref<32x128xf32, #tpu.memory_space<vmem>>, vector<32x128xf32>
    %cst = arith.constant dense<0.000000e+00> : vector<16x128xf32>
    %2 = tpu.matmul %0, %1, %cst {dimension_numbers = #tpu.dot_dimension_numbers<[1], [0], [0], [1], [0, 0, 1, 1], [], []>} : vector<16x32xf32>, vector<32x128xf32>, vector<16x128xf32> -> vector<16x128xf32>
    %c0_3 = arith.constant 0 : index
    %c0_4 = arith.constant 0 : index
    %3 = vector.load %arg3[%c0_3, %c0_4] : memref<1x128xf32, #tpu.memory_space<vmem>>, vector<1x128xf32>
    %4 = vector.broadcast %3 : vector<1x128xf32> to vector<16x128xf32>
    %5 = arith.addf %2, %4 : vector<16x128xf32>
    %c0_5 = arith.constant 0 : index
    %c0_6 = arith.constant 0 : index
    %6 = vector.load %arg4[%c0_5, %c0_6] : memref<16x128xf32, #tpu.memory_space<vmem>>, vector<16x128xf32>
    tpu.vector_store %arg4[%c0_5, %c0_6], %5 {strides = array<i32>} : memref<16x128xf32, #tpu.memory_space<vmem>>, vector<16x128xf32>,
    return
  }
  func.func @transform_0(%arg0: i32) -> (i32, i32) {
    %c0_i32 = arith.constant 0 : i32
    %c0_i32_0 = arith.constant 0 : i32
    return %arg0, %c0_i32 : i32, i32
  }
  func.func @transform_1(%arg0: i32) -> (i32, i32) {
    %c0_i32 = arith.constant 0 : i32
    %c0_i32_0 = arith.constant 0 : i32
    %c0_i32_1 = arith.constant 0 : i32
    return %c0_i32, %c0_i32_0 : i32, i32
  }
  func.func @transform_2(%arg0: i32) -> (i32, i32) {
    %c0_i32 = arith.constant 0 : i32
    %c0_i32_0 = arith.constant 0 : i32
    %c0_i32_1 = arith.constant 0 : i32
    return %c0_i32, %c0_i32_0 : i32, i32
  }
  func.func @transform_3(%arg0: i32) -> (i32, i32) {
    %c0_i32 = arith.constant 0 : i32
    %c0_i32_0 = arith.constant 0 : i32
    return %arg0, %c0_i32 : i32, i32
  }
}

</mosaic_0001>

<llo_original>
// kernel: logreg_forward.1
$region0: #{logreg_forward.1}
  #allocation0 [shape = 'u32[]', space=smem, size = 0x4, offset = 0x4, fixed_abs, tag = 'smem constant byte address 0x4 - core index']
  #allocation1 [shape = 'u32[144,128]{1,0:T(1,128)}', space=vmem, size = 0x12000, scoped, tag = 'internal scratch']
  %s0 = inlined_call_operand.vmem [shape: f32[16,32], index: 0, kind: input, shape index: {}]
  %s1 = inlined_call_operand.vmem [shape: f32[32,128], index: 1, kind: input, shape index: {}]
  %s2 = inlined_call_operand.vmem [shape: f32[1,128], index: 2, kind: input, shape index: {}]
  %s3 = inlined_call_operand.hbm [shape: f32[16,128], index: 3, kind: output, shape index: {}]
  %s4 = sld [smem:[#allocation0]]
  $region22: #{logreg_forward.1} parent=0
    _
  %s6 = ssub.s32 1, %s4
  %s7 = scalar_select 0, %s6, %s4
  $region1: #{logreg_forward.1} parent=0
    #allocation2 [shape = 'u8[8192]{0}', space=vmem, size = 0x2000, scoped, tag = 'output window, operand 0, single buffered']
    #allocation3 [shape = 's32[1]{0}', space=sflag, size = 0x4, scoped, tag = 'scoped memory for logreg_forward.1']
    %8 = vsyncpa [#allocation3], 0
    // Predicated region
    $region2: #{logreg_forward.1} parent=1 // pred_check
      _
    $region3: #{logreg_forward.1} parent=1 // pred_check_branch
      %10 = sbr.rel (0) target = $region5
    $region4: #{logreg_forward.1} parent=1 // pred_region
      _
    $region5: #{logreg_forward.1} parent=1 // pred_fallthru
      _
    // Predicated region
    $region6: #{logreg_forward.1} parent=1 // pred_check
      _
    $region7: #{logreg_forward.1} parent=1 // pred_check_branch
      %12 = sbr.rel (0) target = $region9
    $region8: #{logreg_forward.1} parent=1 // pred_region
      _
    $region9: #{logreg_forward.1} parent=1 // pred_fallthru
      _
    // Predicated region
    $region10: #{logreg_forward.1} parent=1 // pred_check
      _
    $region11: #{logreg_forward.1} parent=1 // pred_check_branch
      %14 = sbr.rel (0) target = $region13
    $region12: #{logreg_forward.1} parent=1 // pred_region
      _
    $region13: #{logreg_forward.1} parent=1 // pred_fallthru
      _
    %v15 = vld [vmem:[%s0] sm:$0xff]
    %v16 = vld [vmem:[%s0 + $0x8] sm:$0xff]
    %v17 = vld [vmem:[%s1] sm:$0xff]
    %v18 = vld [vmem:[%s1 + $0x8] sm:$0xff]
    %v19 = vld [vmem:[%s1 + $0x10] sm:$0xff]
    %v20 = vld [vmem:[%s1 + $0x18] sm:$0xff]
    %v21 = vld [vmem:[%s2] sm:$0x1]
    %v23 = vlaneseq
    %v24 = vshrl.u32 %v23, 7
    %v25 = vsub.s32 0, %v24
    %v26 = vrot.slane %v21, %v25
    %vm28 = vcmask 261120
    %v30 = vsel %vm28, %v15, 0
    %v33 = vsel %vm28, %v16, 0
    %35 = vmatprep.subr.mxu0 0.0
    %36 = vmatpush1.msra.mxu0 %v17
    %37 = vmatprep.subr.mxu0 0.0
    %38 = vmatpush1.msra.mxu0 %v18
    %39 = vmatprep.subr.mxu0 0.0
    %40 = vmatpush1.msra.mxu0 %v19
    %41 = vmatprep.subr.mxu0 0.0
    %42 = vmatpush1.msra.mxu0 %v20
    %43 = vmatprep.subr.mxu0 0.0
    %44 = vmatpush1.msra.mxu0 0.0
    %45 = vmatprep.subr.mxu0 0.0
    %46 = vmatpush1.msra.mxu0 0.0
    %47 = vmatprep.subr.mxu0 0.0
    %48 = vmatpush1.msra.mxu0 0.0
    %49 = vmatprep.subr.mxu0 0.0
    %50 = vmatpush1.msra.mxu0 0.0
    %51 = vmatprep.subr.mxu0 0.0
    %52 = vmatpush1.msra.mxu0 0.0
    %53 = vmatprep.subr.mxu0 0.0
    %54 = vmatpush1.msra.mxu0 0.0
    %55 = vmatprep.subr.mxu0 0.0
    %56 = vmatpush1.msra.mxu0 0.0
    %57 = vmatprep.subr.mxu0 0.0
    %58 = vmatpush1.msra.mxu0 0.0
    %59 = vmatprep.subr.mxu0 0.0
    %60 = vmatpush1.msra.mxu0 0.0
    %61 = vmatprep.subr.mxu0 0.0
    %62 = vmatpush1.msra.mxu0 0.0
    %63 = vmatprep.subr.mxu0 0.0
    %64 = vmatpush1.msra.mxu0 0.0
    %65 = vmatprep.subr.mxu0 0.0
    %66 = vmatpush1.msra.mxu0 0.0
    %67 = vmatprep.subr.mxu0 0.0
    %68 = vmatpush1.msra.mxu0 0.0
    %69 = vmatprep.subr.mxu0 0.0
    %70 = vmatpush1.msra.mxu0 0.0
    %71 = vmatprep.subr.mxu0 0.0
    %72 = vmatpush1.msra.mxu0 0.0
    %73 = vmatprep.subr.mxu0 0.0
    %74 = vmatpush1.msra.mxu0 0.0
    %75 = vmatprep.subr.mxu0 0.0
    %76 = vmatpush1.msra.mxu0 0.0
    %77 = vmatprep.subr.mxu0 0.0
    %78 = vmatpush1.msra.mxu0 0.0
    %79 = vmatprep.subr.mxu0 0.0
    %80 = vmatpush1.msra.mxu0 0.0
    %81 = vmatprep.subr.mxu0 0.0
    %82 = vmatpush1.msra.mxu0 0.0
    %83 = vmatprep.subr.mxu0 0.0
    %84 = vmatpush1.msra.mxu0 0.0
    %85 = vmatprep.subr.mxu0 0.0
    %86 = vmatpush1.msra.mxu0 0.0
    %87 = vmatprep.subr.mxu0 0.0
    %88 = vmatpush1.msra.mxu0 0.0
    %89 = vmatprep.subr.mxu0 0.0
    %90 = vmatpush1.msra.mxu0 0.0
    %91 = vmatprep.subr.mxu0 0.0
    %92 = vmatpush1.msra.mxu0 0.0
    %93 = vmatprep.subr.mxu0 0.0
    %94 = vmatpush1.msra.mxu0 0.0
    %95 = vmatprep.subr.mxu0 0.0
    %96 = vmatpush1.msra.mxu0 0.0
    %97 = vmatprep.subr.mxu0 0.0
    %98 = vmatpush1.msra.mxu0 0.0
    %99 = vmatprep.mubr.f32.mxu0 0.0
    %100 = vmatmul.mubr.f32.gmra.mrb[0].mxu0 %v30
    %v101 = vpop.f32.mrb[0].mxu0
    %v102 = vadd.f32 %v26, %v101
    %v103 = vpop.f32.mrb[0].mxu0
    %104 = vmatprep.mubr.f32.mxu0 0.0
    %105 = vmatmul.mubr.f32.gmra.mrb[0].mxu0 %v33
    %v106 = vpop.f32.mrb[0].mxu0
    %v107 = vadd.f32 %v26, %v106
    %v108 = vpop.f32.mrb[0].mxu0
    %109 = vdwg.mxu0
    %110 = vst [vmem:[#allocation2] sm:$0xff] %v102
    %111 = vst [vmem:[#allocation2 + $0x8] sm:$0xff] %v107
    // Predicated region
    $region14: #{logreg_forward.1} parent=1 // pred_check
      _
    $region15: #{logreg_forward.1} parent=1 // pred_check_branch
      %113 = sbr.rel (0) target = $region17
    $region16: #{logreg_forward.1} parent=1 // pred_region
      %s115 = ssub.s32 256, 256
      %116 = vsyncadd [#allocation3], %s115
      %s117 = sshll.u32 [#allocation2], 4
      %s118 = int_to_ptr.vmem [resolvable:$true] %s117
      %123 = dma.vmem_to_hbm [thread:$0]  %s118, 256, %s3, [#allocation3], 128, 128, 8
    $region17: #{logreg_forward.1} parent=1 // pred_fallthru
      _
    // Predicated region
    $region18: #{logreg_forward.1} parent=1 // pred_check
      _
    $region19: #{logreg_forward.1} parent=1 // pred_check_branch
      %125 = sbr.rel (0) target = $region21
    $region20: #{logreg_forward.1} parent=1 // pred_region
      %126 = dma.done [#allocation3], 256
    $region21: #{logreg_forward.1} parent=1 // pred_fallthru
      _
    %127 = vsyncpa [#allocation3], 1

</llo_original>
